<compile_context>
chip_gen: v7x
topology: tpu7x:2x2x1
jax: 0.10.0
libtpu: 0.0.40
codegen_flags: <defaults>
</compile_context>

<pallas_src>
import math

import jax
import jax.numpy as jnp
from jax.experimental import pallas as pl
from jax.experimental.pallas import tpu as pltpu


_VMEM_LIMIT_CAP = 48 << 20          # safe on v7x (64 MiB physical); fine on v5e/v6e


def _round_up(x, m):
    return ((x + m - 1) // m) * m


# ----------------------------- activations ---------------------------------

_ERF_P = 0.3275911
_ERF_A = (0.254829592, -0.284496736, 1.421413741, -1.453152027, 1.061405429)


def _erf_poly(x):
    """erf via Abramowitz & Stegun 7.1.26 (max abs err ~1.5e-7).

    Built only from ops guaranteed to lower in Mosaic (exp / div / mul / add /
    abs / where), so the 'exact' GELU path never depends on a lax.erf rule.
    """
    ax = jnp.abs(x)
    t = 1.0 / (1.0 + _ERF_P * ax)
    a1, a2, a3, a4, a5 = _ERF_A
    poly = ((((a5 * t + a4) * t + a3) * t + a2) * t + a1) * t
    y = 1.0 - poly * jnp.exp(-(ax * ax))
    return jnp.where(x < 0, -y, y)


def _gelu_erf(x):
    # PyTorch default GELU: 0.5 * x * (1 + erf(x / sqrt(2)))   (erf via poly)
    return 0.5 * x * (1.0 + _erf_poly(x * (1.0 / math.sqrt(2.0))))


def _gelu_erf_ref(x):
    # True exact GELU (lax.erf) for the plain-JAX reference outside the kernel.
    return 0.5 * x * (1.0 + jax.lax.erf(x * (1.0 / math.sqrt(2.0))))


def _gelu_tanh(x):
    # tanh-approximation GELU: transcendental runs on the otherwise-idle EUP
    # slot.  NOT bit-identical to PyTorch's default exact GELU (opt-in).
    c = math.sqrt(2.0 / math.pi)
    return 0.5 * x * (1.0 + jnp.tanh(c * (x + 0.044715 * x * x * x)))


# ------------------------------- kernel ------------------------------------

def _make_pinn_kernel(num_linear, d_in, activation, use_tanh_gelu):
    """Build a kernel closure for a fixed stack of linear layers."""
    if activation == 'gelu':
        act = _gelu_tanh if use_tanh_gelu else _gelu_erf
    else:
        act = jnp.tanh
    vpu_first = d_in <= 8          # tiny K: keep the first layer off the MXU

    def kernel(x_ref, *refs):
        # refs = (w0, b0, w1, b1, ..., w_{L-1}, b_{L-1}, out_ref)
        out_ref = refs[-1]
        params = refs[:-1]
        h = x_ref[...]                                        # (d_in, tile_n)
        for i in range(num_linear):
            w = params[2 * i][...]                            # (out_i, in_i)
            b = params[2 * i + 1][...]                        # (out_i, 1)
            if i == 0 and vpu_first:
                # K=d_in broadcast FMAs on the VPU: avoids padding a K=2
                # contraction to 128/256 on the MXU at the top of every step.
                acc = w[:, 0:1] * h[0:1, :]
                for j in range(1, d_in):
                    acc = acc + w[:, j:j + 1] * h[j:j + 1, :]
                h = acc + b
            else:
                h = jnp.dot(w, h, preferred_element_type=jnp.float32) + b
            if i == num_linear - 1:
                pass                                          # output layer
            elif i == num_linear - 2:
                h = jnp.tanh(h)                               # last hidden
            else:
                h = act(h)
        out_ref[...] = h.astype(out_ref.dtype)

    return kernel


# ------------------------------ wrapper -------------------------------------

def _guess_num_tensorcores():
    """Best effort: v7x has 2 TensorCores per chip; v5e/v6e have 1."""
    try:
        kind = jax.devices()[0].device_kind.lower()
    except Exception:
        return 1
    if "v7" in kind or "7x" in kind:
        return 2
    return 1


def _vmem_estimate_bytes(tile, dims):
    """Rough per-step VMEM footprint (f32), incl. elementwise temporaries."""
    pad8 = lambda d: _round_up(max(int(d), 1), 8)
    io = 2 * (pad8(dims[0]) + pad8(dims[-1])) * tile * 4      # dbl-buffered I/O
    widest = max(pad8(d) for d in dims[1:])
    live = 6 * widest * tile * 4                              # h + GELU temporaries
    params = sum(4 * (pad8(o) * _round_up(max(i, 1), 128) + pad8(o) * 128)
                 for i, o in zip(dims[:-1], dims[1:]))        # lane-padded W, b
    return io + live + params


def pinn_forward(x, weights, biases, activation='gelu', tile_n=8192,
                 use_tanh_gelu=False, feature_major_input=False):
    """PINN MLP forward pass with a Pallas TPU kernel.

    x       : (N, d_in) float32 (PyTorch layout), or (d_in, N) if
              feature_major_input=True (preferred: no extra HBM transpose).
    weights : list of (out_i, in_i) float32 arrays (native nn.Linear layout)
    biases  : list of (out_i,)      float32 arrays
    returns : (N, d_out) float32
    """
    x = jnp.asarray(x, jnp.float32)
    if feature_major_input:
        xt = x                                    # (d_in, N) — no transpose
        d_in, N = xt.shape
    else:
        N, d_in = x.shape
        xt = x.T                                  # one extra XLA transpose kernel

    num_linear = len(weights)
    d_out = int(weights[-1].shape[0])
    dims = [d_in] + [int(w.shape[0]) for w in weights]
    assert int(weights[0].shape[1]) == d_in

    # ---- batch tile: large (amortize ~0.35 us/step), lane-aligned, VMEM-bounded
    tile_cap = max(128, (N // 128) * 128)
    tile = max(128, (min(int(tile_n), tile_cap) // 128) * 128)
    budget = (3 * _VMEM_LIMIT_CAP) // 4           # leave headroom under the cap
    while tile > 128 and _vmem_estimate_bytes(tile, dims) > budget:
        tile -= 128

    # ---- v7x (2 TCs): force an even grid so both cores get equal work.
    #      v5e/v6e (1 TC): keep grid=1 for small batches (no extra step).
    if _guess_num_tensorcores() >= 2:
        g = pl.cdiv(N, tile)
        if g % 2 == 1:
            if g == 1:
                if tile >= 256:
                    tile = _round_up(tile // 2, 128)
            else:
                t = tile
                while t > 128 and pl.cdiv(N, t) % 2 == 1:
                    t -= 128
                if pl.cdiv(N, t) % 2 == 0:
                    tile = t

    grid = pl.cdiv(N, tile)                       # ragged N: partial last block
    vmem_limit = int(min(_VMEM_LIMIT_CAP,
                         max(32 << 20, 2 * _vmem_estimate_bytes(tile, dims))))

    weights = [jnp.asarray(w, jnp.float32) for w in weights]
    biases2d = [jnp.asarray(b, jnp.float32).reshape(-1, 1) for b in biases]

    in_specs = [pl.BlockSpec((d_in, tile), lambda i: (0, i))]
    flat_params = []
    for w, b in zip(weights, biases2d):
        # Tiny constants: whole array, fixed block index -> grid-resident.
        in_specs.append(pl.BlockSpec(w.shape, lambda i: (0, 0)))
        in_specs.append(pl.BlockSpec(b.shape, lambda i: (0, 0)))
        flat_params.extend([w, b])
    out_spec = pl.BlockSpec((d_out, tile), lambda i: (0, i))

    kernel = _make_pinn_kernel(num_linear, d_in, activation, use_tanh_gelu)

    out_fm = pl.pallas_call(
        kernel,
        out_shape=jax.ShapeDtypeStruct((d_out, N), jnp.float32),
        grid_spec=pltpu.PrefetchScalarGridSpec(
            num_scalar_prefetch=0,
            grid=(grid,),
            in_specs=in_specs,
            out_specs=out_spec,
        ),
        compiler_params=pltpu.CompilerParams(
            dimension_semantics=("parallel",),
            vmem_limit_bytes=vmem_limit,
        ),
    )(xt, *flat_params)

    # (d_out, N) -> (N, d_out).  For d_out == 1 this is a layout-free reshape.
    return out_fm.T


# --------------------------- init & reference --------------------------------

def init_pinn_params(layers, key):
    """Deterministic xavier_normal weights in PyTorch (out, in) layout + zero biases."""
    weights, biases = [], []
    for i in range(len(layers) - 1):
        fan_in, fan_out = layers[i], layers[i + 1]
        key, sub = jax.random.split(key)
        std = math.sqrt(2.0 / (fan_in + fan_out))
        weights.append(std * jax.random.normal(sub, (fan_out, fan_in),
                                               dtype=jnp.float32))
        biases.append(jnp.zeros((fan_out,), jnp.float32))
    return weights, biases


def pinn_forward_ref(x, weights, biases, activation='gelu', use_tanh_gelu=False):
    """Plain-JAX reference mirroring the PyTorch forward (batch-major)."""
    if activation == 'gelu':
        act = _gelu_tanh if use_tanh_gelu else _gelu_erf_ref
    else:
        act = jnp.tanh
    num_linear = len(weights)
    h = jnp.asarray(x, jnp.float32)
    for i in range(num_linear):
        h = jnp.dot(h, weights[i].T,
                    precision=jax.lax.Precision.HIGHEST) + biases[i]
        if i == num_linear - 1:
            pass
        elif i == num_linear - 2:
            h = jnp.tanh(h)
        else:
            h = act(h)
    return h


# --------------------------------- demo --------------------------------------

if __name__ == "__main__":
    key = jax.random.PRNGKey(0)

    # Typical Burgers-equation PINN architecture (kept small): (x, t) -> u
    layers = [2, 32, 32, 32, 1]
    weights, biases = init_pinn_params(layers, key)

    # Collocation points produced feature-major (d_in, N): preferred path, no
    # wrapper-side x.T HBM round trip at all.
    key, sub = jax.random.split(key)
    N = 256
    x_fm = jax.random.normal(sub, (layers[0], N), dtype=jnp.float32)
    x_bm = x_fm.T                                           # (N, d_in) for the reference

    out = pinn_forward(x_fm, weights, biases, activation='gelu',
                       feature_major_input=True)
    out = jax.block_until_ready(out)
    ref = pinn_forward_ref(x_bm, weights, biases, activation='gelu')
    assert out.shape == (N, layers[-1])
    assert jnp.allclose(out, ref, atol=1e-4, rtol=1e-4), \
        float(jnp.max(jnp.abs(out - ref)))

    # EUP-friendly tanh-GELU path (opt-in; compared against a matching reference).
    out2 = pinn_forward(x_fm, weights, biases, activation='gelu',
                        use_tanh_gelu=True, feature_major_input=True)
    out2 = jax.block_until_ready(out2)
    ref2 = pinn_forward_ref(x_bm, weights, biases, activation='gelu',
                            use_tanh_gelu=True)
    assert jnp.allclose(out2, ref2, atol=1e-4, rtol=1e-4), \
        float(jnp.max(jnp.abs(out2 - ref2)))

    # Batch-major PyTorch layout + ragged N (exercises the cdiv grid with a
    # partial trailing block -- no wrapper-side padding copy).
    key, sub = jax.random.split(key)
    N2 = 333
    x2 = jax.random.normal(sub, (N2, layers[0]), dtype=jnp.float32)
    out3 = pinn_forward(x2, weights, biases, activation='gelu')
    out3 = jax.block_until_ready(out3)
    ref3 = pinn_forward_ref(x2, weights, biases, activation='gelu')
    assert out3.shape == (N2, layers[-1])
    assert jnp.allclose(out3, ref3, atol=1e-4, rtol=1e-4), \
        float(jnp.max(jnp.abs(out3 - ref3)))

    print("KERNEL_OK")
</pallas_src>

<mosaic_0001>
module attributes {stable_mosaic.version = 11 : i64} {
  func.func @kernel(%arg0: i32, %arg1: memref<2x256xf32, #tpu.memory_space<vmem>>, %arg2: memref<32x2xf32, #tpu.memory_space<vmem>>, %arg3: memref<32x1xf32, #tpu.memory_space<vmem>>, %arg4: memref<32x32xf32, #tpu.memory_space<vmem>>, %arg5: memref<32x1xf32, #tpu.memory_space<vmem>>, %arg6: memref<32x32xf32, #tpu.memory_space<vmem>>, %arg7: memref<32x1xf32, #tpu.memory_space<vmem>>, %arg8: memref<1x32xf32, #tpu.memory_space<vmem>>, %arg9: memref<1x1xf32, #tpu.memory_space<vmem>>, %arg10: memref<1x256xf32, #tpu.memory_space<vmem>>) attributes {dimension_semantics = [#tpu.dimension_semantics<parallel>], iteration_bounds = array<i64: 1>, scalar_prefetch = 0 : i64, scratch_operands = 0 : i64, tpu.core_type = #tpu.core_type<tc>, window_params = [{transform_indices = @transform_0, window_bounds = array<i64: 2, 256>}, {pipeline_mode = #tpu.pipeline_mode<synchronous>, transform_indices = @transform_1, window_bounds = array<i64: 32, 2>}, {pipeline_mode = #tpu.pipeline_mode<synchronous>, transform_indices = @transform_2, window_bounds = array<i64: 32, 1>}, {pipeline_mode = #tpu.pipeline_mode<synchronous>, transform_indices = @transform_3, window_bounds = array<i64: 32, 32>}, {pipeline_mode = #tpu.pipeline_mode<synchronous>, transform_indices = @transform_4, window_bounds = array<i64: 32, 1>}, {pipeline_mode = #tpu.pipeline_mode<synchronous>, transform_indices = @transform_5, window_bounds = array<i64: 32, 32>}, {pipeline_mode = #tpu.pipeline_mode<synchronous>, transform_indices = @transform_6, window_bounds = array<i64: 32, 1>}, {pipeline_mode = #tpu.pipeline_mode<synchronous>, transform_indices = @transform_7, window_bounds = array<i64: 1, 32>}, {pipeline_mode = #tpu.pipeline_mode<synchronous>, transform_indices = @transform_8, window_bounds = array<i64: 1, 1>}, {transform_indices = @transform_9, window_bounds = array<i64: 1, 256>}]} {
    %c0 = arith.constant 0 : index
    %c0_0 = arith.constant 0 : index
    %0 = vector.load %arg1[%c0, %c0_0] : memref<2x256xf32, #tpu.memory_space<vmem>>, vector<2x256xf32>
    %c0_1 = arith.constant 0 : index
    %c0_2 = arith.constant 0 : index
    %1 = vector.load %arg2[%c0_1, %c0_2] : memref<32x2xf32, #tpu.memory_space<vmem>>, vector<32x2xf32>
    %c0_3 = arith.constant 0 : index
    %c0_4 = arith.constant 0 : index
    %2 = vector.load %arg3[%c0_3, %c0_4] : memref<32x1xf32, #tpu.memory_space<vmem>>, vector<32x1xf32>
    %3 = vector.extract_strided_slice %1 {offsets = [0, 0], sizes = [32, 1], strides = [1, 1]} : vector<32x2xf32> to vector<32x1xf32>
    %4 = vector.extract_strided_slice %0 {offsets = [0, 0], sizes = [1, 256], strides = [1, 1]} : vector<2x256xf32> to vector<1x256xf32>
    %5 = vector.broadcast %3 : vector<32x1xf32> to vector<32x256xf32>
    %6 = vector.broadcast %4 : vector<1x256xf32> to vector<32x256xf32>
    %7 = arith.mulf %5, %6 : vector<32x256xf32>
    %8 = vector.extract_strided_slice %1 {offsets = [0, 1], sizes = [32, 1], strides = [1, 1]} : vector<32x2xf32> to vector<32x1xf32>
    %9 = vector.extract_strided_slice %0 {offsets = [1, 0], sizes = [1, 256], strides = [1, 1]} : vector<2x256xf32> to vector<1x256xf32>
    %10 = vector.broadcast %8 : vector<32x1xf32> to vector<32x256xf32>
    %11 = vector.broadcast %9 : vector<1x256xf32> to vector<32x256xf32>
    %12 = arith.mulf %10, %11 : vector<32x256xf32>
    %13 = arith.addf %7, %12 : vector<32x256xf32>
    %14 = vector.broadcast %2 : vector<32x1xf32> to vector<32x256xf32>
    %15 = arith.addf %13, %14 : vector<32x256xf32>
    %cst = arith.constant 5.000000e-01 : f32
    %16 = vector.broadcast %cst : f32 to vector<32x256xf32>
    %17 = arith.mulf %16, %15 : vector<32x256xf32>
    %cst_5 = arith.constant 0.707106769 : f32
    %18 = vector.broadcast %cst_5 : f32 to vector<32x256xf32>
    %19 = arith.mulf %15, %18 : vector<32x256xf32>
    %20 = math.absf %19 : vector<32x256xf32>
    %cst_6 = arith.constant 0.327591091 : f32
    %21 = vector.broadcast %cst_6 : f32 to vector<32x256xf32>
    %22 = arith.mulf %21, %20 : vector<32x256xf32>
    %cst_7 = arith.constant 1.000000e+00 : f32
    %23 = vector.broadcast %cst_7 : f32 to vector<32x256xf32>
    %24 = arith.addf %23, %22 : vector<32x256xf32>
    %cst_8 = arith.constant 1.000000e+00 : f32
    %25 = vector.broadcast %cst_8 : f32 to vector<32x256xf32>
    %26 = arith.divf %25, %24 : vector<32x256xf32>
    %cst_9 = arith.constant 1.06140542 : f32
    %27 = vector.broadcast %cst_9 : f32 to vector<32x256xf32>
    %28 = arith.mulf %27, %26 : vector<32x256xf32>
    %cst_10 = arith.constant -1.45315206 : f32
    %29 = vector.broadcast %cst_10 : f32 to vector<32x256xf32>
    %30 = arith.addf %28, %29 : vector<32x256xf32>
    %31 = arith.mulf %30, %26 : vector<32x256xf32>
    %cst_11 = arith.constant 1.42141378 : f32
    %32 = vector.broadcast %cst_11 : f32 to vector<32x256xf32>
    %33 = arith.addf %31, %32 : vector<32x256xf32>
    %34 = arith.mulf %33, %26 : vector<32x256xf32>
    %cst_12 = arith.constant -0.284496725 : f32
    %35 = vector.broadcast %cst_12 : f32 to vector<32x256xf32>
    %36 = arith.addf %34, %35 : vector<32x256xf32>
    %37 = arith.mulf %36, %26 : vector<32x256xf32>
    %cst_13 = arith.constant 0.254829586 : f32
    %38 = vector.broadcast %cst_13 : f32 to vector<32x256xf32>
    %39 = arith.addf %37, %38 : vector<32x256xf32>
    %40 = arith.mulf %39, %26 : vector<32x256xf32>
    %41 = arith.mulf %20, %20 : vector<32x256xf32>
    %cst_14 = arith.constant 0.000000e+00 : f32
    %42 = vector.broadcast %cst_14 : f32 to vector<32x256xf32>
    %43 = arith.subf %42, %41 : vector<32x256xf32>
    %44 = math.exp %43 : vector<32x256xf32>
    %45 = arith.mulf %40, %44 : vector<32x256xf32>
    %cst_15 = arith.constant 1.000000e+00 : f32
    %46 = vector.broadcast %cst_15 : f32 to vector<32x256xf32>
    %47 = arith.subf %46, %45 : vector<32x256xf32>
    %cst_16 = arith.constant 0.000000e+00 : f32
    %48 = vector.broadcast %cst_16 : f32 to vector<32x256xf32>
    %49 = arith.cmpf olt, %19, %48 : vector<32x256xf32>
    %cst_17 = arith.constant 0.000000e+00 : f32
    %50 = vector.broadcast %cst_17 : f32 to vector<32x256xf32>
    %51 = arith.subf %50, %47 : vector<32x256xf32>
    %52 = arith.select %49, %51, %47 : vector<32x256xi1>, vector<32x256xf32>
    %cst_18 = arith.constant 1.000000e+00 : f32
    %53 = vector.broadcast %cst_18 : f32 to vector<32x256xf32>
    %54 = arith.addf %53, %52 : vector<32x256xf32>
    %55 = arith.mulf %17, %54 : vector<32x256xf32>
    %c0_19 = arith.constant 0 : index
    %c0_20 = arith.constant 0 : index
    %56 = vector.load %arg4[%c0_19, %c0_20] : memref<32x32xf32, #tpu.memory_space<vmem>>, vector<32x32xf32>
    %c0_21 = arith.constant 0 : index
    %c0_22 = arith.constant 0 : index
    %57 = vector.load %arg5[%c0_21, %c0_22] : memref<32x1xf32, #tpu.memory_space<vmem>>, vector<32x1xf32>
    %cst_23 = arith.constant dense<0.000000e+00> : vector<32x256xf32>
    %58 = tpu.matmul %56, %55, %cst_23 {dimension_numbers = #tpu.dot_dimension_numbers<[1], [0], [0], [1], [0, 0, 1, 1], [], []>} : vector<32x32xf32>, vector<32x256xf32>, vector<32x256xf32> -> vector<32x256xf32>
    %59 = vector.broadcast %57 : vector<32x1xf32> to vector<32x256xf32>
    %60 = arith.addf %58, %59 : vector<32x256xf32>
    %cst_24 = arith.constant 5.000000e-01 : f32
    %61 = vector.broadcast %cst_24 : f32 to vector<32x256xf32>
    %62 = arith.mulf %61, %60 : vector<32x256xf32>
    %cst_25 = arith.constant 0.707106769 : f32
    %63 = vector.broadcast %cst_25 : f32 to vector<32x256xf32>
    %64 = arith.mulf %60, %63 : vector<32x256xf32>
    %65 = math.absf %64 : vector<32x256xf32>
    %cst_26 = arith.constant 0.327591091 : f32
    %66 = vector.broadcast %cst_26 : f32 to vector<32x256xf32>
    %67 = arith.mulf %66, %65 : vector<32x256xf32>
    %cst_27 = arith.constant 1.000000e+00 : f32
    %68 = vector.broadcast %cst_27 : f32 to vector<32x256xf32>
    %69 = arith.addf %68, %67 : vector<32x256xf32>
    %cst_28 = arith.constant 1.000000e+00 : f32
    %70 = vector.broadcast %cst_28 : f32 to vector<32x256xf32>
    %71 = arith.divf %70, %69 : vector<32x256xf32>
    %cst_29 = arith.constant 1.06140542 : f32
    %72 = vector.broadcast %cst_29 : f32 to vector<32x256xf32>
    %73 = arith.mulf %72, %71 : vector<32x256xf32>
    %cst_30 = arith.constant -1.45315206 : f32
    %74 = vector.broadcast %cst_30 : f32 to vector<32x256xf32>
    %75 = arith.addf %73, %74 : vector<32x256xf32>
    %76 = arith.mulf %75, %71 : vector<32x256xf32>
    %cst_31 = arith.constant 1.42141378 : f32
    %77 = vector.broadcast %cst_31 : f32 to vector<32x256xf32>
    %78 = arith.addf %76, %77 : vector<32x256xf32>
    %79 = arith.mulf %78, %71 : vector<32x256xf32>
    %cst_32 = arith.constant -0.284496725 : f32
    %80 = vector.broadcast %cst_32 : f32 to vector<32x256xf32>
    %81 = arith.addf %79, %80 : vector<32x256xf32>
    %82 = arith.mulf %81, %71 : vector<32x256xf32>
    %cst_33 = arith.constant 0.254829586 : f32
    %83 = vector.broadcast %cst_33 : f32 to vector<32x256xf32>
    %84 = arith.addf %82, %83 : vector<32x256xf32>
    %85 = arith.mulf %84, %71 : vector<32x256xf32>
    %86 = arith.mulf %65, %65 : vector<32x256xf32>
    %cst_34 = arith.constant 0.000000e+00 : f32
    %87 = vector.broadcast %cst_34 : f32 to vector<32x256xf32>
    %88 = arith.subf %87, %86 : vector<32x256xf32>
    %89 = math.exp %88 : vector<32x256xf32>
    %90 = arith.mulf %85, %89 : vector<32x256xf32>
    %cst_35 = arith.constant 1.000000e+00 : f32
    %91 = vector.broadcast %cst_35 : f32 to vector<32x256xf32>
    %92 = arith.subf %91, %90 : vector<32x256xf32>
    %cst_36 = arith.constant 0.000000e+00 : f32
    %93 = vector.broadcast %cst_36 : f32 to vector<32x256xf32>
    %94 = arith.cmpf olt, %64, %93 : vector<32x256xf32>
    %cst_37 = arith.constant 0.000000e+00 : f32
    %95 = vector.broadcast %cst_37 : f32 to vector<32x256xf32>
    %96 = arith.subf %95, %92 : vector<32x256xf32>
    %97 = arith.select %94, %96, %92 : vector<32x256xi1>, vector<32x256xf32>
    %cst_38 = arith.constant 1.000000e+00 : f32
    %98 = vector.broadcast %cst_38 : f32 to vector<32x256xf32>
    %99 = arith.addf %98, %97 : vector<32x256xf32>
    %100 = arith.mulf %62, %99 : vector<32x256xf32>
    %c0_39 = arith.constant 0 : index
    %c0_40 = arith.constant 0 : index
    %101 = vector.load %arg6[%c0_39, %c0_40] : memref<32x32xf32, #tpu.memory_space<vmem>>, vector<32x32xf32>
    %c0_41 = arith.constant 0 : index
    %c0_42 = arith.constant 0 : index
    %102 = vector.load %arg7[%c0_41, %c0_42] : memref<32x1xf32, #tpu.memory_space<vmem>>, vector<32x1xf32>
    %cst_43 = arith.constant dense<0.000000e+00> : vector<32x256xf32>
    %103 = tpu.matmul %101, %100, %cst_43 {dimension_numbers = #tpu.dot_dimension_numbers<[1], [0], [0], [1], [0, 0, 1, 1], [], []>} : vector<32x32xf32>, vector<32x256xf32>, vector<32x256xf32> -> vector<32x256xf32>
    %104 = vector.broadcast %102 : vector<32x1xf32> to vector<32x256xf32>
    %105 = arith.addf %103, %104 : vector<32x256xf32>
    %106 = math.tanh %105 : vector<32x256xf32>
    %c0_44 = arith.constant 0 : index
    %c0_45 = arith.constant 0 : index
    %107 = vector.load %arg8[%c0_44, %c0_45] : memref<1x32xf32, #tpu.memory_space<vmem>>, vector<1x32xf32>
    %c0_46 = arith.constant 0 : index
    %c0_47 = arith.constant 0 : index
    %108 = vector.load %arg9[%c0_46, %c0_47] : memref<1x1xf32, #tpu.memory_space<vmem>>, vector<1x1xf32>
    %cst_48 = arith.constant dense<0.000000e+00> : vector<1x256xf32>
    %109 = tpu.matmul %107, %106, %cst_48 {dimension_numbers = #tpu.dot_dimension_numbers<[1], [0], [0], [1], [0, 0, 1, 1], [], []>} : vector<1x32xf32>, vector<32x256xf32>, vector<1x256xf32> -> vector<1x256xf32>
    %110 = vector.broadcast %108 : vector<1x1xf32> to vector<1x256xf32>
    %111 = arith.addf %109, %110 : vector<1x256xf32>
    %c0_49 = arith.constant 0 : index
    %c0_50 = arith.constant 0 : index
    %112 = vector.load %arg10[%c0_49, %c0_50] : memref<1x256xf32, #tpu.memory_space<vmem>>, vector<1x256xf32>
    tpu.vector_store %arg10[%c0_49, %c0_50], %111 {strides = array<i32>} : memref<1x256xf32, #tpu.memory_space<vmem>>, vector<1x256xf32>,
    return
  }
  func.func @transform_0(%arg0: i32) -> (i32, i32) {
    %c0_i32 = arith.constant 0 : i32
    %c0_i32_0 = arith.constant 0 : i32
    return %c0_i32, %arg0 : i32, i32
  }
  func.func @transform_1(%arg0: i32) -> (i32, i32) {
    %c0_i32 = arith.constant 0 : i32
    %c0_i32_0 = arith.constant 0 : i32
    %c0_i32_1 = arith.constant 0 : i32
    return %c0_i32, %c0_i32_0 : i32, i32
  }
  func.func @transform_2(%arg0: i32) -> (i32, i32) {
    %c0_i32 = arith.constant 0 : i32
    %c0_i32_0 = arith.constant 0 : i32
    %c0_i32_1 = arith.constant 0 : i32
    return %c0_i32, %c0_i32_0 : i32, i32
  }
  func.func @transform_3(%arg0: i32) -> (i32, i32) {
    %c0_i32 = arith.constant 0 : i32
    %c0_i32_0 = arith.constant 0 : i32
    %c0_i32_1 = arith.constant 0 : i32
    return %c0_i32, %c0_i32_0 : i32, i32
  }
  func.func @transform_4(%arg0: i32) -> (i32, i32) {
    %c0_i32 = arith.constant 0 : i32
    %c0_i32_0 = arith.constant 0 : i32
    %c0_i32_1 = arith.constant 0 : i32
    return %c0_i32, %c0_i32_0 : i32, i32
  }
  func.func @transform_5(%arg0: i32) -> (i32, i32) {
    %c0_i32 = arith.constant 0 : i32
    %c0_i32_0 = arith.constant 0 : i32
    %c0_i32_1 = arith.constant 0 : i32
    return %c0_i32, %c0_i32_0 : i32, i32
  }
  func.func @transform_6(%arg0: i32) -> (i32, i32) {
    %c0_i32 = arith.constant 0 : i32
    %c0_i32_0 = arith.constant 0 : i32
    %c0_i32_1 = arith.constant 0 : i32
    return %c0_i32, %c0_i32_0 : i32, i32
  }
  func.func @transform_7(%arg0: i32) -> (i32, i32) {
    %c0_i32 = arith.constant 0 : i32
    %c0_i32_0 = arith.constant 0 : i32
    %c0_i32_1 = arith.constant 0 : i32
    return %c0_i32, %c0_i32_0 : i32, i32
  }
  func.func @transform_8(%arg0: i32) -> (i32, i32) {
    %c0_i32 = arith.constant 0 : i32
    %c0_i32_0 = arith.constant 0 : i32
    %c0_i32_1 = arith.constant 0 : i32
    return %c0_i32, %c0_i32_0 : i32, i32
  }
  func.func @transform_9(%arg0: i32) -> (i32, i32) {
    %c0_i32 = arith.constant 0 : i32
    %c0_i32_0 = arith.constant 0 : i32
    return %c0_i32, %arg0 : i32, i32
  }
}

</mosaic_0001>

<llo_original>
// kernel: tpu_custom_call.1
$region0: #{tpu_custom_call.1}
  #allocation0 [shape = 'u32[]', space=smem, size = 0x4, offset = 0x4, fixed_abs, tag = 'smem constant byte address 0x4 - core index']
  #allocation1 [shape = 'u32[144,128]{1,0:T(1,128)}', space=vmem, size = 0x12000, scoped, tag = 'internal scratch']
  #allocation2 [shape = 'f32[1,1]{1,0:T(1,128)S(1)}', space=vmem, size = 0x200, scoped, tag = 'scoped memory for tpu_custom_call.1']
  %s0 = inlined_call_operand.vmem [shape: f32[2,256], index: 0, kind: input, shape index: {}]
  %s1 = inlined_call_operand.vmem [shape: f32[32,2], index: 1, kind: input, shape index: {}]
  %s2 = inlined_call_operand.vmem [shape: f32[32,1], index: 2, kind: input, shape index: {}]
  %s3 = inlined_call_operand.vmem [shape: f32[32,32], index: 3, kind: input, shape index: {}]
  %s4 = inlined_call_operand.vmem [shape: f32[32,1], index: 4, kind: input, shape index: {}]
  %s5 = inlined_call_operand.vmem [shape: f32[32,32], index: 5, kind: input, shape index: {}]
  %s6 = inlined_call_operand.vmem [shape: f32[32,1], index: 6, kind: input, shape index: {}]
  %s7 = inlined_call_operand.vmem [shape: f32[1,32], index: 7, kind: input, shape index: {}]
  %s8 = inlined_call_operand.<no memory space> [shape: f32[1,1], index: 8, kind: input, shape index: {}]
  %s9 = inlined_call_operand.hbm [shape: f32[1,256], index: 9, kind: output, shape index: {}]
  %s10 = sld [smem:[#allocation0]]
  $region46: #{tpu_custom_call.1} parent=0
    _
  %s12 = ssub.s32 1, %s10
  %s13 = scalar_select 0, %s12, %s10
  %v14 = vstv %s8
  %15 = vst [vmem:[#allocation2] sm:$0x1] %v14
  $region1: #{tpu_custom_call.1} parent=0
    #allocation3 [shape = 'u8[1024]{0}', space=vmem, size = 0x400, scoped, tag = 'output window, operand 0, single buffered']
    #allocation4 [shape = 's32[1]{0}', space=sflag, size = 0x4, scoped, tag = 'scoped memory for tpu_custom_call.1']
    %16 = vsyncpa [#allocation4], 0
    // Predicated region
    $region2: #{tpu_custom_call.1} parent=1 // pred_check
      _
    $region3: #{tpu_custom_call.1} parent=1 // pred_check_branch
      %18 = sbr.rel (0) target = $region5
    $region4: #{tpu_custom_call.1} parent=1 // pred_region
      _
    $region5: #{tpu_custom_call.1} parent=1 // pred_fallthru
      _
    // Predicated region
    $region6: #{tpu_custom_call.1} parent=1 // pred_check
      _
    $region7: #{tpu_custom_call.1} parent=1 // pred_check_branch
      %20 = sbr.rel (0) target = $region9
    $region8: #{tpu_custom_call.1} parent=1 // pred_region
      _
    $region9: #{tpu_custom_call.1} parent=1 // pred_fallthru
      _
    // Predicated region
    $region10: #{tpu_custom_call.1} parent=1 // pred_check
      _
    $region11: #{tpu_custom_call.1} parent=1 // pred_check_branch
      %22 = sbr.rel (0) target = $region13
    $region12: #{tpu_custom_call.1} parent=1 // pred_region
      _
    $region13: #{tpu_custom_call.1} parent=1 // pred_fallthru
      _
    // Predicated region
    $region14: #{tpu_custom_call.1} parent=1 // pred_check
      _
    $region15: #{tpu_custom_call.1} parent=1 // pred_check_branch
      %24 = sbr.rel (0) target = $region17
    $region16: #{tpu_custom_call.1} parent=1 // pred_region
      _
    $region17: #{tpu_custom_call.1} parent=1 // pred_fallthru
      _
    // Predicated region
    $region18: #{tpu_custom_call.1} parent=1 // pred_check
      _
    $region19: #{tpu_custom_call.1} parent=1 // pred_check_branch
      %26 = sbr.rel (0) target = $region21
    $region20: #{tpu_custom_call.1} parent=1 // pred_region
      _
    $region21: #{tpu_custom_call.1} parent=1 // pred_fallthru
      _
    // Predicated region
    $region22: #{tpu_custom_call.1} parent=1 // pred_check
      _
    $region23: #{tpu_custom_call.1} parent=1 // pred_check_branch
      %28 = sbr.rel (0) target = $region25
    $region24: #{tpu_custom_call.1} parent=1 // pred_region
      _
    $region25: #{tpu_custom_call.1} parent=1 // pred_fallthru
      _
    // Predicated region
    $region26: #{tpu_custom_call.1} parent=1 // pred_check
      _
    $region27: #{tpu_custom_call.1} parent=1 // pred_check_branch
      %30 = sbr.rel (0) target = $region29
    $region28: #{tpu_custom_call.1} parent=1 // pred_region
      _
    $region29: #{tpu_custom_call.1} parent=1 // pred_fallthru
      _
    // Predicated region
    $region30: #{tpu_custom_call.1} parent=1 // pred_check
      _
    $region31: #{tpu_custom_call.1} parent=1 // pred_check_branch
      %32 = sbr.rel (0) target = $region33
    $region32: #{tpu_custom_call.1} parent=1 // pred_region
      _
    $region33: #{tpu_custom_call.1} parent=1 // pred_fallthru
      _
    // Predicated region
    $region34: #{tpu_custom_call.1} parent=1 // pred_check
      _
    $region35: #{tpu_custom_call.1} parent=1 // pred_check_branch
      %34 = sbr.rel (0) target = $region37
    $region36: #{tpu_custom_call.1} parent=1 // pred_region
      _
    $region37: #{tpu_custom_call.1} parent=1 // pred_fallthru
      _
    %v35 = vld [vmem:[%s0] sm:$0xf]
    %v36 = vld [vmem:[%s1] sm:$0xff]
    %v37 = vld [vmem:[%s1 + $0x8] sm:$0xff]
    %v38 = vld [vmem:[%s1 + $0x10] sm:$0xff]
    %v39 = vld [vmem:[%s1 + $0x18] sm:$0xff]
    %v40 = vld [vmem:[%s2] sm:$0xff]
    %v41 = vld [vmem:[%s2 + $0x8] sm:$0xff]
    %v42 = vld [vmem:[%s2 + $0x10] sm:$0xff]
    %v43 = vld [vmem:[%s2 + $0x18] sm:$0xff]
    %45 = vset.pattern.permute.xlu0 0
    %46 = vperm.xlu0 %45, %v36
    %v47 = vpop.permute.xlu0 %46
    %50 = vset.pattern.permute.xlu0 0
    %51 = vperm.xlu0 %50, %v37
    %v52 = vpop.permute.xlu0 %51
    %55 = vset.pattern.permute.xlu0 0
    %56 = vperm.xlu0 %55, %v38
    %v57 = vpop.permute.xlu0 %56
    %60 = vset.pattern.permute.xlu0 0
    %61 = vperm.xlu0 %60, %v39
    %v62 = vpop.permute.xlu0 %61
    %v65 = vlaneseq
    %v66 = vshrl.u32 %v65, 7
    %v67 = vsub.s32 0, %v66
    %v68 = vrot.slane %v35, %v67
    %v69 = vlaneseq
    %v70 = vshrl.u32 %v69, 7
    %v71 = vsub.s32 2, %v70
    %v72 = vrot.slane %v35, %v71
    %v75 = vlaneseq
    %v76 = vshrl.u32 %v75, 7
    %v77 = vsub.s32 0, %v76
    %v78 = vrot.slane %v68, %v77
    %v79 = vlaneseq
    %v80 = vshrl.u32 %v79, 7
    %v81 = vsub.s32 0, %v80
    %v82 = vrot.slane %v72, %v81
    %v83 = vmul.f32 %v47, %v78
    %v84 = vmul.f32 %v47, %v82
    %v85 = vmul.f32 %v52, %v78
    %v86 = vmul.f32 %v52, %v82
    %v87 = vmul.f32 %v57, %v78
    %v88 = vmul.f32 %v57, %v82
    %v89 = vmul.f32 %v62, %v78
    %v90 = vmul.f32 %v62, %v82
    %91 = vset.pattern.permute.xlu0 1
    %92 = vperm.xlu0 %91, %v36
    %v93 = vpop.permute.xlu0 %92
    %95 = vset.pattern.permute.xlu0 1
    %96 = vperm.xlu0 %95, %v37
    %v97 = vpop.permute.xlu0 %96
    %99 = vset.pattern.permute.xlu0 1
    %100 = vperm.xlu0 %99, %v38
    %v101 = vpop.permute.xlu0 %100
    %103 = vset.pattern.permute.xlu0 1
    %104 = vperm.xlu0 %103, %v39
    %v105 = vpop.permute.xlu0 %104
    %v107 = vlaneseq
    %v108 = vshrl.u32 %v107, 7
    %v109 = vsub.s32 1, %v108
    %v110 = vrot.slane %v35, %v109
    %v111 = vlaneseq
    %v112 = vshrl.u32 %v111, 7
    %v113 = vsub.s32 3, %v112
    %v114 = vrot.slane %v35, %v113
    %v117 = vlaneseq
    %v118 = vshrl.u32 %v117, 7
    %v119 = vsub.s32 1, %v118
    %v120 = vrot.slane %v110, %v119
    %v121 = vlaneseq
    %v122 = vshrl.u32 %v121, 7
    %v123 = vsub.s32 1, %v122
    %v124 = vrot.slane %v114, %v123
    %v125 = vmul.f32 %v93, %v120
    %v126 = vmul.f32 %v93, %v124
    %v127 = vmul.f32 %v97, %v120
    %v128 = vmul.f32 %v97, %v124
    %v129 = vmul.f32 %v101, %v120
    %v130 = vmul.f32 %v101, %v124
    %v131 = vmul.f32 %v105, %v120
    %v132 = vmul.f32 %v105, %v124
    %v133 = vadd.f32 %v83, %v125
    %v134 = vadd.f32 %v84, %v126
    %v135 = vadd.f32 %v85, %v127
    %v136 = vadd.f32 %v86, %v128
    %v137 = vadd.f32 %v87, %v129
    %v138 = vadd.f32 %v88, %v130
    %v139 = vadd.f32 %v89, %v131
    %v140 = vadd.f32 %v90, %v132
    %142 = vset.pattern.permute.xlu0 0
    %143 = vperm.xlu0 %142, %v40
    %v144 = vpop.permute.xlu0 %143
    %147 = vset.pattern.permute.xlu0 0
    %148 = vperm.xlu0 %147, %v41
    %v149 = vpop.permute.xlu0 %148
    %152 = vset.pattern.permute.xlu0 0
    %153 = vperm.xlu0 %152, %v42
    %v154 = vpop.permute.xlu0 %153
    %157 = vset.pattern.permute.xlu0 0
    %158 = vperm.xlu0 %157, %v43
    %v159 = vpop.permute.xlu0 %158
    %v161 = vadd.f32 %v133, %v144
    %v162 = vadd.f32 %v134, %v144
    %v163 = vadd.f32 %v135, %v149
    %v164 = vadd.f32 %v136, %v149
    %v165 = vadd.f32 %v137, %v154
    %v166 = vadd.f32 %v138, %v154
    %v167 = vadd.f32 %v139, %v159
    %v168 = vadd.f32 %v140, %v159
    %v169 = vmul.f32 %v161, 0.5
    %v170 = vmul.f32 %v162, 0.5
    %v171 = vmul.f32 %v163, 0.5
    %v172 = vmul.f32 %v164, 0.5
    %v173 = vmul.f32 %v165, 0.5
    %v174 = vmul.f32 %v166, 0.5
    %v175 = vmul.f32 %v167, 0.5
    %v176 = vmul.f32 %v168, 0.5
    %v177 = vmul.f32 %v161, 0.70710677
    %v178 = vmul.f32 %v162, 0.70710677
    %v179 = vmul.f32 %v163, 0.70710677
    %v180 = vmul.f32 %v164, 0.70710677
    %v181 = vmul.f32 %v165, 0.70710677
    %v182 = vmul.f32 %v166, 0.70710677
    %v183 = vmul.f32 %v167, 0.70710677
    %v184 = vmul.f32 %v168, 0.70710677
    %v185 = vand.u32 2147483647, %v177
    %v186 = vand.u32 2147483647, %v178
    %v187 = vand.u32 2147483647, %v179
    %v188 = vand.u32 2147483647, %v180
    %v189 = vand.u32 2147483647, %v181
    %v190 = vand.u32 2147483647, %v182
    %v191 = vand.u32 2147483647, %v183
    %v192 = vand.u32 2147483647, %v184
    %v193 = vmul.f32 %v185, 0.3275911
    %v194 = vmul.f32 %v186, 0.3275911
    %v195 = vmul.f32 %v187, 0.3275911
    %v196 = vmul.f32 %v188, 0.3275911
    %v197 = vmul.f32 %v189, 0.3275911
    %v198 = vmul.f32 %v190, 0.3275911
    %v199 = vmul.f32 %v191, 0.3275911
    %v200 = vmul.f32 %v192, 0.3275911
    %v201 = vadd.f32 %v193, 1.0
    %v202 = vadd.f32 %v194, 1.0
    %v203 = vadd.f32 %v195, 1.0
    %v204 = vadd.f32 %v196, 1.0
    %v205 = vadd.f32 %v197, 1.0
    %v206 = vadd.f32 %v198, 1.0
    %v207 = vadd.f32 %v199, 1.0
    %v208 = vadd.f32 %v200, 1.0
    %v209 = vrcp.pop %v201
    %v210 = vmul.f32 1.0, %v209
    %v211 = vrcp.pop %v202
    %v212 = vmul.f32 1.0, %v211
    %v213 = vrcp.pop %v203
    %v214 = vmul.f32 1.0, %v213
    %v215 = vrcp.pop %v204
    %v216 = vmul.f32 1.0, %v215
    %v217 = vrcp.pop %v205
    %v218 = vmul.f32 1.0, %v217
    %v219 = vrcp.pop %v206
    %v220 = vmul.f32 1.0, %v219
    %v221 = vrcp.pop %v207
    %v222 = vmul.f32 1.0, %v221
    %v223 = vrcp.pop %v208
    %v224 = vmul.f32 1.0, %v223
    %v225 = vmul.f32 %v210, 1.0614054
    %v226 = vmul.f32 %v212, 1.0614054
    %v227 = vmul.f32 %v214, 1.0614054
    %v228 = vmul.f32 %v216, 1.0614054
    %v229 = vmul.f32 %v218, 1.0614054
    %v230 = vmul.f32 %v220, 1.0614054
    %v231 = vmul.f32 %v222, 1.0614054
    %v232 = vmul.f32 %v224, 1.0614054
    %v233 = vadd.f32 %v225, -1.4531521
    %v234 = vadd.f32 %v226, -1.4531521
    %v235 = vadd.f32 %v227, -1.4531521
    %v236 = vadd.f32 %v228, -1.4531521
    %v237 = vadd.f32 %v229, -1.4531521
    %v238 = vadd.f32 %v230, -1.4531521
    %v239 = vadd.f32 %v231, -1.4531521
    %v240 = vadd.f32 %v232, -1.4531521
    %v241 = vmul.f32 %v233, %v210
    %v242 = vmul.f32 %v234, %v212
    %v243 = vmul.f32 %v235, %v214
    %v244 = vmul.f32 %v236, %v216
    %v245 = vmul.f32 %v237, %v218
    %v246 = vmul.f32 %v238, %v220
    %v247 = vmul.f32 %v239, %v222
    %v248 = vmul.f32 %v240, %v224
    %v249 = vadd.f32 %v241, 1.4214138
    %v250 = vadd.f32 %v242, 1.4214138
    %v251 = vadd.f32 %v243, 1.4214138
    %v252 = vadd.f32 %v244, 1.4214138
    %v253 = vadd.f32 %v245, 1.4214138
    %v254 = vadd.f32 %v246, 1.4214138
    %v255 = vadd.f32 %v247, 1.4214138
    %v256 = vadd.f32 %v248, 1.4214138
    %v257 = vmul.f32 %v249, %v210
    %v258 = vmul.f32 %v250, %v212
    %v259 = vmul.f32 %v251, %v214
    %v260 = vmul.f32 %v252, %v216
    %v261 = vmul.f32 %v253, %v218
    %v262 = vmul.f32 %v254, %v220
    %v263 = vmul.f32 %v255, %v222
    %v264 = vmul.f32 %v256, %v224
    %v265 = vadd.f32 %v257, -0.28449672
    %v266 = vadd.f32 %v258, -0.28449672
    %v267 = vadd.f32 %v259, -0.28449672
    %v268 = vadd.f32 %v260, -0.28449672
    %v269 = vadd.f32 %v261, -0.28449672
    %v270 = vadd.f32 %v262, -0.28449672
    %v271 = vadd.f32 %v263, -0.28449672
    %v272 = vadd.f32 %v264, -0.28449672
    %v273 = vmul.f32 %v265, %v210
    %v274 = vmul.f32 %v266, %v212
    %v275 = vmul.f32 %v267, %v214
    %v276 = vmul.f32 %v268, %v216
    %v277 = vmul.f32 %v269, %v218
    %v278 = vmul.f32 %v270, %v220
    %v279 = vmul.f32 %v271, %v222
    %v280 = vmul.f32 %v272, %v224
    %v281 = vadd.f32 %v273, 0.2548296
    %v282 = vadd.f32 %v274, 0.2548296
    %v283 = vadd.f32 %v275, 0.2548296
    %v284 = vadd.f32 %v276, 0.2548296
    %v285 = vadd.f32 %v277, 0.2548296
    %v286 = vadd.f32 %v278, 0.2548296
    %v287 = vadd.f32 %v279, 0.2548296
    %v288 = vadd.f32 %v280, 0.2548296
    %v289 = vmul.f32 %v281, %v210
    %v290 = vmul.f32 %v282, %v212
    %v291 = vmul.f32 %v283, %v214
    %v292 = vmul.f32 %v284, %v216
    %v293 = vmul.f32 %v285, %v218
    %v294 = vmul.f32 %v286, %v220
    %v295 = vmul.f32 %v287, %v222
    %v296 = vmul.f32 %v288, %v224
    %v297 = vmul.f32 %v185, %v185
    %v298 = vmul.f32 %v186, %v186
    %v299 = vmul.f32 %v187, %v187
    %v300 = vmul.f32 %v188, %v188
    %v301 = vmul.f32 %v189, %v189
    %v302 = vmul.f32 %v190, %v190
    %v303 = vmul.f32 %v191, %v191
    %v304 = vmul.f32 %v192, %v192
    %v305 = vsub.f32 0.0, %v297
    %v306 = vsub.f32 0.0, %v298
    %v307 = vsub.f32 0.0, %v299
    %v308 = vsub.f32 0.0, %v300
    %v309 = vsub.f32 0.0, %v301
    %v310 = vsub.f32 0.0, %v302
    %v311 = vsub.f32 0.0, %v303
    %v312 = vsub.f32 0.0, %v304
    %v313 = vmul.f32 %v305, 1.442695
    %v314 = vpow.pop %v313
    %v315 = vmul.f32 %v306, 1.442695
    %v316 = vpow.pop %v315
    %v317 = vmul.f32 %v307, 1.442695
    %v318 = vpow.pop %v317
    %v319 = vmul.f32 %v308, 1.442695
    %v320 = vpow.pop %v319
    %v321 = vmul.f32 %v309, 1.442695
    %v322 = vpow.pop %v321
    %v323 = vmul.f32 %v310, 1.442695
    %v324 = vpow.pop %v323
    %v325 = vmul.f32 %v311, 1.442695
    %v326 = vpow.pop %v325
    %v327 = vmul.f32 %v312, 1.442695
    %v328 = vpow.pop %v327
    %v329 = vmul.f32 %v289, %v314
    %v330 = vmul.f32 %v290, %v316
    %v331 = vmul.f32 %v291, %v318
    %v332 = vmul.f32 %v292, %v320
    %v333 = vmul.f32 %v293, %v322
    %v334 = vmul.f32 %v294, %v324
    %v335 = vmul.f32 %v295, %v326
    %v336 = vmul.f32 %v296, %v328
    %v337 = vsub.f32 1.0, %v329
    %v338 = vsub.f32 1.0, %v330
    %v339 = vsub.f32 1.0, %v331
    %v340 = vsub.f32 1.0, %v332
    %v341 = vsub.f32 1.0, %v333
    %v342 = vsub.f32 1.0, %v334
    %v343 = vsub.f32 1.0, %v335
    %v344 = vsub.f32 1.0, %v336
    %vm345 = vcmp.lt.f32.partialorder %v177, 0.0
    %vm346 = vcmp.lt.f32.partialorder %v178, 0.0
    %vm347 = vcmp.lt.f32.partialorder %v179, 0.0
    %vm348 = vcmp.lt.f32.partialorder %v180, 0.0
    %vm349 = vcmp.lt.f32.partialorder %v181, 0.0
    %vm350 = vcmp.lt.f32.partialorder %v182, 0.0
    %vm351 = vcmp.lt.f32.partialorder %v183, 0.0
    %vm352 = vcmp.lt.f32.partialorder %v184, 0.0
    %v353 = vsub.f32 0.0, %v337
    %v354 = vsub.f32 0.0, %v338
    %v355 = vsub.f32 0.0, %v339
    %v356 = vsub.f32 0.0, %v340
    %v357 = vsub.f32 0.0, %v341
    %v358 = vsub.f32 0.0, %v342
    %v359 = vsub.f32 0.0, %v343
    %v360 = vsub.f32 0.0, %v344
    %v361 = vsel %vm345, %v353, %v337
    %v362 = vsel %vm346, %v354, %v338
    %v363 = vsel %vm347, %v355, %v339
    %v364 = vsel %vm348, %v356, %v340
    %v365 = vsel %vm349, %v357, %v341
    %v366 = vsel %vm350, %v358, %v342
    %v367 = vsel %vm351, %v359, %v343
    %v368 = vsel %vm352, %v360, %v344
    %v369 = vadd.f32 %v361, 1.0
    %v370 = vadd.f32 %v362, 1.0
    %v371 = vadd.f32 %v363, 1.0
    %v372 = vadd.f32 %v364, 1.0
    %v373 = vadd.f32 %v365, 1.0
    %v374 = vadd.f32 %v366, 1.0
    %v375 = vadd.f32 %v367, 1.0
    %v376 = vadd.f32 %v368, 1.0
    %v377 = vmul.f32 %v169, %v369
    %v378 = vmul.f32 %v170, %v370
    %v379 = vmul.f32 %v171, %v371
    %v380 = vmul.f32 %v172, %v372
    %v381 = vmul.f32 %v173, %v373
    %v382 = vmul.f32 %v174, %v374
    %v383 = vmul.f32 %v175, %v375
    %v384 = vmul.f32 %v176, %v376
    %v385 = vld [vmem:[%s3] sm:$0xff]
    %v386 = vld [vmem:[%s3 + $0x8] sm:$0xff]
    %v387 = vld [vmem:[%s3 + $0x10] sm:$0xff]
    %v388 = vld [vmem:[%s3 + $0x18] sm:$0xff]
    %v389 = vld [vmem:[%s4] sm:$0xff]
    %v390 = vld [vmem:[%s4 + $0x8] sm:$0xff]
    %v391 = vld [vmem:[%s4 + $0x10] sm:$0xff]
    %v392 = vld [vmem:[%s4 + $0x18] sm:$0xff]
    %394 = vset.pattern.permute.xlu0 0
    %395 = vperm.xlu0 %394, %v389
    %v396 = vpop.permute.xlu0 %395
    %399 = vset.pattern.permute.xlu0 0
    %400 = vperm.xlu0 %399, %v390
    %v401 = vpop.permute.xlu0 %400
    %404 = vset.pattern.permute.xlu0 0
    %405 = vperm.xlu0 %404, %v391
    %v406 = vpop.permute.xlu0 %405
    %409 = vset.pattern.permute.xlu0 0
    %410 = vperm.xlu0 %409, %v392
    %v411 = vpop.permute.xlu0 %410
    %vm413 = vcmask 261120
    %v415 = vsel %vm413, %v385, 0
    %v418 = vsel %vm413, %v386, 0
    %v421 = vsel %vm413, %v387, 0
    %v424 = vsel %vm413, %v388, 0
    %426 = vmatprep.subr.mxu0 %v378
    %427 = vmatpush1.msra.mxu0 %v377
    %428 = vmatprep.subr.mxu0 %v380
    %429 = vmatpush1.msra.mxu0 %v379
    %430 = vmatprep.subr.mxu0 %v382
    %431 = vmatpush1.msra.mxu0 %v381
    %432 = vmatprep.subr.mxu0 %v384
    %433 = vmatpush1.msra.mxu0 %v383
    %434 = vmatprep.subr.mxu0 0.0
    %435 = vmatpush1.msra.mxu0 0.0
    %436 = vmatprep.subr.mxu0 0.0
    %437 = vmatpush1.msra.mxu0 0.0
    %438 = vmatprep.subr.mxu0 0.0
    %439 = vmatpush1.msra.mxu0 0.0
    %440 = vmatprep.subr.mxu0 0.0
    %441 = vmatpush1.msra.mxu0 0.0
    %442 = vmatprep.subr.mxu0 0.0
    %443 = vmatpush1.msra.mxu0 0.0
    %444 = vmatprep.subr.mxu0 0.0
    %445 = vmatpush1.msra.mxu0 0.0
    %446 = vmatprep.subr.mxu0 0.0
    %447 = vmatpush1.msra.mxu0 0.0
    %448 = vmatprep.subr.mxu0 0.0
    %449 = vmatpush1.msra.mxu0 0.0
    %450 = vmatprep.subr.mxu0 0.0
    %451 = vmatpush1.msra.mxu0 0.0
    %452 = vmatprep.subr.mxu0 0.0
    %453 = vmatpush1.msra.mxu0 0.0
    %454 = vmatprep.subr.mxu0 0.0
    %455 = vmatpush1.msra.mxu0 0.0
    %456 = vmatprep.subr.mxu0 0.0
    %457 = vmatpush1.msra.mxu0 0.0
    %458 = vmatprep.subr.mxu0 0.0
    %459 = vmatpush1.msra.mxu0 0.0
    %460 = vmatprep.subr.mxu0 0.0
    %461 = vmatpush1.msra.mxu0 0.0
    %462 = vmatprep.subr.mxu0 0.0
    %463 = vmatpush1.msra.mxu0 0.0
    %464 = vmatprep.subr.mxu0 0.0
    %465 = vmatpush1.msra.mxu0 0.0
    %466 = vmatprep.subr.mxu0 0.0
    %467 = vmatpush1.msra.mxu0 0.0
    %468 = vmatprep.subr.mxu0 0.0
    %469 = vmatpush1.msra.mxu0 0.0
    %470 = vmatprep.subr.mxu0 0.0
    %471 = vmatpush1.msra.mxu0 0.0
    %472 = vmatprep.subr.mxu0 0.0
    %473 = vmatpush1.msra.mxu0 0.0
    %474 = vmatprep.subr.mxu0 0.0
    %475 = vmatpush1.msra.mxu0 0.0
    %476 = vmatprep.subr.mxu0 0.0
    %477 = vmatpush1.msra.mxu0 0.0
    %478 = vmatprep.subr.mxu0 0.0
    %479 = vmatpush1.msra.mxu0 0.0
    %480 = vmatprep.subr.mxu0 0.0
    %481 = vmatpush1.msra.mxu0 0.0
    %482 = vmatprep.subr.mxu0 0.0
    %483 = vmatpush1.msra.mxu0 0.0
    %484 = vmatprep.subr.mxu0 0.0
    %485 = vmatpush1.msra.mxu0 0.0
    %486 = vmatprep.subr.mxu0 0.0
    %487 = vmatpush1.msra.mxu0 0.0
    %488 = vmatprep.subr.mxu0 0.0
    %489 = vmatpush1.msra.mxu0 0.0
    %490 = vmatprep.mubr.f32.mxu0 0.0
    %491 = vmatmul.mubr.f32.gmra.mrb[0].mxu0 %v415
    %v492 = vpop.f32.mrb[0].mxu0
    %v493 = vadd.f32 %v396, %v492
    %v494 = vpop.f32.mrb[0].mxu0
    %v495 = vadd.f32 %v396, %v494
    %496 = vmatprep.mubr.f32.mxu0 0.0
    %497 = vmatmul.mubr.f32.gmra.mrb[0].mxu0 %v418
    %v498 = vpop.f32.mrb[0].mxu0
    %v499 = vadd.f32 %v401, %v498
    %v500 = vpop.f32.mrb[0].mxu0
    %v501 = vadd.f32 %v401, %v500
    %502 = vmatprep.mubr.f32.mxu0 0.0
    %503 = vmatmul.mubr.f32.gmra.mrb[0].mxu0 %v421
    %v504 = vpop.f32.mrb[0].mxu0
    %v505 = vadd.f32 %v406, %v504
    %v506 = vpop.f32.mrb[0].mxu0
    %v507 = vadd.f32 %v406, %v506
    %508 = vmatprep.mubr.f32.mxu0 0.0
    %509 = vmatmul.mubr.f32.gmra.mrb[0].mxu0 %v424
    %v510 = vpop.f32.mrb[0].mxu0
    %v511 = vadd.f32 %v411, %v510
    %v512 = vpop.f32.mrb[0].mxu0
    %v513 = vadd.f32 %v411, %v512
    %514 = vdwg.mxu0
    %v515 = vmul.f32 %v493, 0.5
    %v516 = vmul.f32 %v495, 0.5
    %v517 = vmul.f32 %v499, 0.5
    %v518 = vmul.f32 %v501, 0.5
    %v519 = vmul.f32 %v505, 0.5
    %v520 = vmul.f32 %v507, 0.5
    %v521 = vmul.f32 %v511, 0.5
    %v522 = vmul.f32 %v513, 0.5
    %v523 = vmul.f32 %v493, 0.70710677
    %v524 = vmul.f32 %v495, 0.70710677
    %v525 = vmul.f32 %v499, 0.70710677
    %v526 = vmul.f32 %v501, 0.70710677
    %v527 = vmul.f32 %v505, 0.70710677
    %v528 = vmul.f32 %v507, 0.70710677
    %v529 = vmul.f32 %v511, 0.70710677
    %v530 = vmul.f32 %v513, 0.70710677
    %v531 = vand.u32 2147483647, %v523
    %v532 = vand.u32 2147483647, %v524
    %v533 = vand.u32 2147483647, %v525
    %v534 = vand.u32 2147483647, %v526
    %v535 = vand.u32 2147483647, %v527
    %v536 = vand.u32 2147483647, %v528
    %v537 = vand.u32 2147483647, %v529
    %v538 = vand.u32 2147483647, %v530
    %v539 = vmul.f32 %v531, 0.3275911
    %v540 = vmul.f32 %v532, 0.3275911
    %v541 = vmul.f32 %v533, 0.3275911
    %v542 = vmul.f32 %v534, 0.3275911
    %v543 = vmul.f32 %v535, 0.3275911
    %v544 = vmul.f32 %v536, 0.3275911
    %v545 = vmul.f32 %v537, 0.3275911
    %v546 = vmul.f32 %v538, 0.3275911
    %v547 = vadd.f32 %v539, 1.0
    %v548 = vadd.f32 %v540, 1.0
    %v549 = vadd.f32 %v541, 1.0
    %v550 = vadd.f32 %v542, 1.0
    %v551 = vadd.f32 %v543, 1.0
    %v552 = vadd.f32 %v544, 1.0
    %v553 = vadd.f32 %v545, 1.0
    %v554 = vadd.f32 %v546, 1.0
    %v555 = vrcp.pop %v547
    %v556 = vmul.f32 1.0, %v555
    %v557 = vrcp.pop %v548
    %v558 = vmul.f32 1.0, %v557
    %v559 = vrcp.pop %v549
    %v560 = vmul.f32 1.0, %v559
    %v561 = vrcp.pop %v550
    %v562 = vmul.f32 1.0, %v561
    %v563 = vrcp.pop %v551
    %v564 = vmul.f32 1.0, %v563
    %v565 = vrcp.pop %v552
    %v566 = vmul.f32 1.0, %v565
    %v567 = vrcp.pop %v553
    %v568 = vmul.f32 1.0, %v567
    %v569 = vrcp.pop %v554
    %v570 = vmul.f32 1.0, %v569
    %v571 = vmul.f32 %v556, 1.0614054
    %v572 = vmul.f32 %v558, 1.0614054
    %v573 = vmul.f32 %v560, 1.0614054
    %v574 = vmul.f32 %v562, 1.0614054
    %v575 = vmul.f32 %v564, 1.0614054
    %v576 = vmul.f32 %v566, 1.0614054
    %v577 = vmul.f32 %v568, 1.0614054
    %v578 = vmul.f32 %v570, 1.0614054
    %v579 = vadd.f32 %v571, -1.4531521
    %v580 = vadd.f32 %v572, -1.4531521
    %v581 = vadd.f32 %v573, -1.4531521
    %v582 = vadd.f32 %v574, -1.4531521
    %v583 = vadd.f32 %v575, -1.4531521
    %v584 = vadd.f32 %v576, -1.4531521
    %v585 = vadd.f32 %v577, -1.4531521
    %v586 = vadd.f32 %v578, -1.4531521
    %v587 = vmul.f32 %v579, %v556
    %v588 = vmul.f32 %v580, %v558
    %v589 = vmul.f32 %v581, %v560
    %v590 = vmul.f32 %v582, %v562
    %v591 = vmul.f32 %v583, %v564
    %v592 = vmul.f32 %v584, %v566
    %v593 = vmul.f32 %v585, %v568
    %v594 = vmul.f32 %v586, %v570
    %v595 = vadd.f32 %v587, 1.4214138
    %v596 = vadd.f32 %v588, 1.4214138
    %v597 = vadd.f32 %v589, 1.4214138
    %v598 = vadd.f32 %v590, 1.4214138
    %v599 = vadd.f32 %v591, 1.4214138
    %v600 = vadd.f32 %v592, 1.4214138
    %v601 = vadd.f32 %v593, 1.4214138
    %v602 = vadd.f32 %v594, 1.4214138
    %v603 = vmul.f32 %v595, %v556
    %v604 = vmul.f32 %v596, %v558
    %v605 = vmul.f32 %v597, %v560
    %v606 = vmul.f32 %v598, %v562
    %v607 = vmul.f32 %v599, %v564
    %v608 = vmul.f32 %v600, %v566
    %v609 = vmul.f32 %v601, %v568
    %v610 = vmul.f32 %v602, %v570
    %v611 = vadd.f32 %v603, -0.28449672
    %v612 = vadd.f32 %v604, -0.28449672
    %v613 = vadd.f32 %v605, -0.28449672
    %v614 = vadd.f32 %v606, -0.28449672
    %v615 = vadd.f32 %v607, -0.28449672
    %v616 = vadd.f32 %v608, -0.28449672
    %v617 = vadd.f32 %v609, -0.28449672
    %v618 = vadd.f32 %v610, -0.28449672
    %v619 = vmul.f32 %v611, %v556
    %v620 = vmul.f32 %v612, %v558
    %v621 = vmul.f32 %v613, %v560
    %v622 = vmul.f32 %v614, %v562
    %v623 = vmul.f32 %v615, %v564
    %v624 = vmul.f32 %v616, %v566
    %v625 = vmul.f32 %v617, %v568
    %v626 = vmul.f32 %v618, %v570
    %v627 = vadd.f32 %v619, 0.2548296
    %v628 = vadd.f32 %v620, 0.2548296
    %v629 = vadd.f32 %v621, 0.2548296
    %v630 = vadd.f32 %v622, 0.2548296
    %v631 = vadd.f32 %v623, 0.2548296
    %v632 = vadd.f32 %v624, 0.2548296
    %v633 = vadd.f32 %v625, 0.2548296
    %v634 = vadd.f32 %v626, 0.2548296
    %v635 = vmul.f32 %v627, %v556
    %v636 = vmul.f32 %v628, %v558
    %v637 = vmul.f32 %v629, %v560
    %v638 = vmul.f32 %v630, %v562
    %v639 = vmul.f32 %v631, %v564
    %v640 = vmul.f32 %v632, %v566
    %v641 = vmul.f32 %v633, %v568
    %v642 = vmul.f32 %v634, %v570
    %v643 = vmul.f32 %v531, %v531
    %v644 = vmul.f32 %v532, %v532
    %v645 = vmul.f32 %v533, %v533
    %v646 = vmul.f32 %v534, %v534
    %v647 = vmul.f32 %v535, %v535
    %v648 = vmul.f32 %v536, %v536
    %v649 = vmul.f32 %v537, %v537
    %v650 = vmul.f32 %v538, %v538
    %v651 = vsub.f32 0.0, %v643
    %v652 = vsub.f32 0.0, %v644
    %v653 = vsub.f32 0.0, %v645
    %v654 = vsub.f32 0.0, %v646
    %v655 = vsub.f32 0.0, %v647
    %v656 = vsub.f32 0.0, %v648
    %v657 = vsub.f32 0.0, %v649
    %v658 = vsub.f32 0.0, %v650
    %v659 = vmul.f32 %v651, 1.442695
    %v660 = vpow.pop %v659
    %v661 = vmul.f32 %v652, 1.442695
    %v662 = vpow.pop %v661
    %v663 = vmul.f32 %v653, 1.442695
    %v664 = vpow.pop %v663
    %v665 = vmul.f32 %v654, 1.442695
    %v666 = vpow.pop %v665
    %v667 = vmul.f32 %v655, 1.442695
    %v668 = vpow.pop %v667
    %v669 = vmul.f32 %v656, 1.442695
    %v670 = vpow.pop %v669
    %v671 = vmul.f32 %v657, 1.442695
    %v672 = vpow.pop %v671
    %v673 = vmul.f32 %v658, 1.442695
    %v674 = vpow.pop %v673
    %v675 = vmul.f32 %v635, %v660
    %v676 = vmul.f32 %v636, %v662
    %v677 = vmul.f32 %v637, %v664
    %v678 = vmul.f32 %v638, %v666
    %v679 = vmul.f32 %v639, %v668
    %v680 = vmul.f32 %v640, %v670
    %v681 = vmul.f32 %v641, %v672
    %v682 = vmul.f32 %v642, %v674
    %v683 = vsub.f32 1.0, %v675
    %v684 = vsub.f32 1.0, %v676
    %v685 = vsub.f32 1.0, %v677
    %v686 = vsub.f32 1.0, %v678
    %v687 = vsub.f32 1.0, %v679
    %v688 = vsub.f32 1.0, %v680
    %v689 = vsub.f32 1.0, %v681
    %v690 = vsub.f32 1.0, %v682
    %vm691 = vcmp.lt.f32.partialorder %v523, 0.0
    %vm692 = vcmp.lt.f32.partialorder %v524, 0.0
    %vm693 = vcmp.lt.f32.partialorder %v525, 0.0
    %vm694 = vcmp.lt.f32.partialorder %v526, 0.0
    %vm695 = vcmp.lt.f32.partialorder %v527, 0.0
    %vm696 = vcmp.lt.f32.partialorder %v528, 0.0
    %vm697 = vcmp.lt.f32.partialorder %v529, 0.0
    %vm698 = vcmp.lt.f32.partialorder %v530, 0.0
    %v699 = vsub.f32 0.0, %v683
    %v700 = vsub.f32 0.0, %v684
    %v701 = vsub.f32 0.0, %v685
    %v702 = vsub.f32 0.0, %v686
    %v703 = vsub.f32 0.0, %v687
    %v704 = vsub.f32 0.0, %v688
    %v705 = vsub.f32 0.0, %v689
    %v706 = vsub.f32 0.0, %v690
    %v707 = vsel %vm691, %v699, %v683
    %v708 = vsel %vm692, %v700, %v684
    %v709 = vsel %vm693, %v701, %v685
    %v710 = vsel %vm694, %v702, %v686
    %v711 = vsel %vm695, %v703, %v687
    %v712 = vsel %vm696, %v704, %v688
    %v713 = vsel %vm697, %v705, %v689
    %v714 = vsel %vm698, %v706, %v690
    %v715 = vadd.f32 %v707, 1.0
    %v716 = vadd.f32 %v708, 1.0
    %v717 = vadd.f32 %v709, 1.0
    %v718 = vadd.f32 %v710, 1.0
    %v719 = vadd.f32 %v711, 1.0
    %v720 = vadd.f32 %v712, 1.0
    %v721 = vadd.f32 %v713, 1.0
    %v722 = vadd.f32 %v714, 1.0
    %v723 = vmul.f32 %v515, %v715
    %v724 = vmul.f32 %v516, %v716
    %v725 = vmul.f32 %v517, %v717
    %v726 = vmul.f32 %v518, %v718
    %v727 = vmul.f32 %v519, %v719
    %v728 = vmul.f32 %v520, %v720
    %v729 = vmul.f32 %v521, %v721
    %v730 = vmul.f32 %v522, %v722
    %v731 = vld [vmem:[%s5] sm:$0xff]
    %v732 = vld [vmem:[%s5 + $0x8] sm:$0xff]
    %v733 = vld [vmem:[%s5 + $0x10] sm:$0xff]
    %v734 = vld [vmem:[%s5 + $0x18] sm:$0xff]
    %v735 = vld [vmem:[%s6] sm:$0xff]
    %v736 = vld [vmem:[%s6 + $0x8] sm:$0xff]
    %v737 = vld [vmem:[%s6 + $0x10] sm:$0xff]
    %v738 = vld [vmem:[%s6 + $0x18] sm:$0xff]
    %740 = vset.pattern.permute.xlu0 0
    %741 = vperm.xlu0 %740, %v735
    %v742 = vpop.permute.xlu0 %741
    %745 = vset.pattern.permute.xlu0 0
    %746 = vperm.xlu0 %745, %v736
    %v747 = vpop.permute.xlu0 %746
    %750 = vset.pattern.permute.xlu0 0
    %751 = vperm.xlu0 %750, %v737
    %v752 = vpop.permute.xlu0 %751
    %755 = vset.pattern.permute.xlu0 0
    %756 = vperm.xlu0 %755, %v738
    %v757 = vpop.permute.xlu0 %756
    %v760 = vsel %vm413, %v731, 0
    %v763 = vsel %vm413, %v732, 0
    %v766 = vsel %vm413, %v733, 0
    %v769 = vsel %vm413, %v734, 0
    %771 = vmatprep.subr.mxu0 %v724
    %772 = vmatpush1.msra.mxu0 %v723
    %773 = vmatprep.subr.mxu0 %v726
    %774 = vmatpush1.msra.mxu0 %v725
    %775 = vmatprep.subr.mxu0 %v728
    %776 = vmatpush1.msra.mxu0 %v727
    %777 = vmatprep.subr.mxu0 %v730
    %778 = vmatpush1.msra.mxu0 %v729
    %779 = vmatprep.subr.mxu0 0.0
    %780 = vmatpush1.msra.mxu0 0.0
    %781 = vmatprep.subr.mxu0 0.0
    %782 = vmatpush1.msra.mxu0 0.0
    %783 = vmatprep.subr.mxu0 0.0
    %784 = vmatpush1.msra.mxu0 0.0
    %785 = vmatprep.subr.mxu0 0.0
    %786 = vmatpush1.msra.mxu0 0.0
    %787 = vmatprep.subr.mxu0 0.0
    %788 = vmatpush1.msra.mxu0 0.0
    %789 = vmatprep.subr.mxu0 0.0
    %790 = vmatpush1.msra.mxu0 0.0
    %791 = vmatprep.subr.mxu0 0.0
    %792 = vmatpush1.msra.mxu0 0.0
    %793 = vmatprep.subr.mxu0 0.0
    %794 = vmatpush1.msra.mxu0 0.0
    %795 = vmatprep.subr.mxu0 0.0
    %796 = vmatpush1.msra.mxu0 0.0
    %797 = vmatprep.subr.mxu0 0.0
    %798 = vmatpush1.msra.mxu0 0.0
    %799 = vmatprep.subr.mxu0 0.0
    %800 = vmatpush1.msra.mxu0 0.0
    %801 = vmatprep.subr.mxu0 0.0
    %802 = vmatpush1.msra.mxu0 0.0
    %803 = vmatprep.subr.mxu0 0.0
    %804 = vmatpush1.msra.mxu0 0.0
    %805 = vmatprep.subr.mxu0 0.0
    %806 = vmatpush1.msra.mxu0 0.0
    %807 = vmatprep.subr.mxu0 0.0
    %808 = vmatpush1.msra.mxu0 0.0
    %809 = vmatprep.subr.mxu0 0.0
    %810 = vmatpush1.msra.mxu0 0.0
    %811 = vmatprep.subr.mxu0 0.0
    %812 = vmatpush1.msra.mxu0 0.0
    %813 = vmatprep.subr.mxu0 0.0
    %814 = vmatpush1.msra.mxu0 0.0
    %815 = vmatprep.subr.mxu0 0.0
    %816 = vmatpush1.msra.mxu0 0.0
    %817 = vmatprep.subr.mxu0 0.0
    %818 = vmatpush1.msra.mxu0 0.0
    %819 = vmatprep.subr.mxu0 0.0
    %820 = vmatpush1.msra.mxu0 0.0
    %821 = vmatprep.subr.mxu0 0.0
    %822 = vmatpush1.msra.mxu0 0.0
    %823 = vmatprep.subr.mxu0 0.0
    %824 = vmatpush1.msra.mxu0 0.0
    %825 = vmatprep.subr.mxu0 0.0
    %826 = vmatpush1.msra.mxu0 0.0
    %827 = vmatprep.subr.mxu0 0.0
    %828 = vmatpush1.msra.mxu0 0.0
    %829 = vmatprep.subr.mxu0 0.0
    %830 = vmatpush1.msra.mxu0 0.0
    %831 = vmatprep.subr.mxu0 0.0
    %832 = vmatpush1.msra.mxu0 0.0
    %833 = vmatprep.subr.mxu0 0.0
    %834 = vmatpush1.msra.mxu0 0.0
    %835 = vmatprep.mubr.f32.mxu0 0.0
    %836 = vmatmul.mubr.f32.gmra.mrb[0].mxu0 %v760
    %v837 = vpop.f32.mrb[0].mxu0
    %v838 = vadd.f32 %v742, %v837
    %v839 = vpop.f32.mrb[0].mxu0
    %v840 = vadd.f32 %v742, %v839
    %841 = vmatprep.mubr.f32.mxu0 0.0
    %842 = vmatmul.mubr.f32.gmra.mrb[0].mxu0 %v763
    %v843 = vpop.f32.mrb[0].mxu0
    %v844 = vadd.f32 %v747, %v843
    %v845 = vpop.f32.mrb[0].mxu0
    %v846 = vadd.f32 %v747, %v845
    %847 = vmatprep.mubr.f32.mxu0 0.0
    %848 = vmatmul.mubr.f32.gmra.mrb[0].mxu0 %v766
    %v849 = vpop.f32.mrb[0].mxu0
    %v850 = vadd.f32 %v752, %v849
    %v851 = vpop.f32.mrb[0].mxu0
    %v852 = vadd.f32 %v752, %v851
    %853 = vmatprep.mubr.f32.mxu0 0.0
    %854 = vmatmul.mubr.f32.gmra.mrb[0].mxu0 %v769
    %v855 = vpop.f32.mrb[0].mxu0
    %v856 = vadd.f32 %v757, %v855
    %v857 = vpop.f32.mrb[0].mxu0
    %v858 = vadd.f32 %v757, %v857
    %859 = vdwg.mxu0
    %v860 = vtanh.pop %v838
    %v861 = vtanh.pop %v840
    %v862 = vtanh.pop %v844
    %v863 = vtanh.pop %v846
    %v864 = vtanh.pop %v850
    %v865 = vtanh.pop %v852
    %v866 = vtanh.pop %v856
    %v867 = vtanh.pop %v858
    %v868 = vld [vmem:[%s7] sm:$0x1]
    %v869 = vld [vmem:[#allocation2] sm:$0x1]
    %871 = vset.pattern.permute.xlu0 0
    %872 = vperm.xlu0 %871, %v869
    %v873 = vpop.permute.xlu0 %872
    %v875 = vlaneseq
    %v876 = vshrl.u32 %v875, 7
    %v877 = vsub.s32 0, %v876
    %v878 = vrot.slane %v873, %v877
    %v880 = vsel %vm413, %v868, 0
    %882 = vmatprep.subr.mxu0 %v861
    %883 = vmatpush1.msra.mxu0 %v860
    %884 = vmatprep.subr.mxu0 %v863
    %885 = vmatpush1.msra.mxu0 %v862
    %886 = vmatprep.subr.mxu0 %v865
    %887 = vmatpush1.msra.mxu0 %v864
    %888 = vmatprep.subr.mxu0 %v867
    %889 = vmatpush1.msra.mxu0 %v866
    %890 = vmatprep.subr.mxu0 0.0
    %891 = vmatpush1.msra.mxu0 0.0
    %892 = vmatprep.subr.mxu0 0.0
    %893 = vmatpush1.msra.mxu0 0.0
    %894 = vmatprep.subr.mxu0 0.0
    %895 = vmatpush1.msra.mxu0 0.0
    %896 = vmatprep.subr.mxu0 0.0
    %897 = vmatpush1.msra.mxu0 0.0
    %898 = vmatprep.subr.mxu0 0.0
    %899 = vmatpush1.msra.mxu0 0.0
    %900 = vmatprep.subr.mxu0 0.0
    %901 = vmatpush1.msra.mxu0 0.0
    %902 = vmatprep.subr.mxu0 0.0
    %903 = vmatpush1.msra.mxu0 0.0
    %904 = vmatprep.subr.mxu0 0.0
    %905 = vmatpush1.msra.mxu0 0.0
    %906 = vmatprep.subr.mxu0 0.0
    %907 = vmatpush1.msra.mxu0 0.0
    %908 = vmatprep.subr.mxu0 0.0
    %909 = vmatpush1.msra.mxu0 0.0
    %910 = vmatprep.subr.mxu0 0.0
    %911 = vmatpush1.msra.mxu0 0.0
    %912 = vmatprep.subr.mxu0 0.0
    %913 = vmatpush1.msra.mxu0 0.0
    %914 = vmatprep.subr.mxu0 0.0
    %915 = vmatpush1.msra.mxu0 0.0
    %916 = vmatprep.subr.mxu0 0.0
    %917 = vmatpush1.msra.mxu0 0.0
    %918 = vmatprep.subr.mxu0 0.0
    %919 = vmatpush1.msra.mxu0 0.0
    %920 = vmatprep.subr.mxu0 0.0
    %921 = vmatpush1.msra.mxu0 0.0
    %922 = vmatprep.subr.mxu0 0.0
    %923 = vmatpush1.msra.mxu0 0.0
    %924 = vmatprep.subr.mxu0 0.0
    %925 = vmatpush1.msra.mxu0 0.0
    %926 = vmatprep.subr.mxu0 0.0
    %927 = vmatpush1.msra.mxu0 0.0
    %928 = vmatprep.subr.mxu0 0.0
    %929 = vmatpush1.msra.mxu0 0.0
    %930 = vmatprep.subr.mxu0 0.0
    %931 = vmatpush1.msra.mxu0 0.0
    %932 = vmatprep.subr.mxu0 0.0
    %933 = vmatpush1.msra.mxu0 0.0
    %934 = vmatprep.subr.mxu0 0.0
    %935 = vmatpush1.msra.mxu0 0.0
    %936 = vmatprep.subr.mxu0 0.0
    %937 = vmatpush1.msra.mxu0 0.0
    %938 = vmatprep.subr.mxu0 0.0
    %939 = vmatpush1.msra.mxu0 0.0
    %940 = vmatprep.subr.mxu0 0.0
    %941 = vmatpush1.msra.mxu0 0.0
    %942 = vmatprep.subr.mxu0 0.0
    %943 = vmatpush1.msra.mxu0 0.0
    %944 = vmatprep.subr.mxu0 0.0
    %945 = vmatpush1.msra.mxu0 0.0
    %946 = vmatprep.mubr.f32.mxu0 0.0
    %947 = vmatmul.mubr.f32.gmra.mrb[0].mxu0 %v880
    %v948 = vpop.f32.mrb[0].mxu0
    %v949 = vadd.f32 %v878, %v948
    %v950 = vpop.f32.mrb[0].mxu0
    %v951 = vadd.f32 %v878, %v950
    %952 = vdwg.mxu0
    %v955 = vcombine.low %v949, %v951
    %v957 = vunpack.c.l.s4 1966171168
    %v958 = vunpack.c.0.s8 %v957
    %v959 = vlaneseq
    %v960 = vshrl.u32 %v959, 7
    %v961 = vsub.s32 %v958, %v960
    %v962 = vrot.slane %v955, %v961
    %v964 = vunpack.c.l.s4 1966171168
    %v965 = vunpack.c.0.s8 %v964
    %v966 = vlaneseq
    %v967 = vshrl.u32 %v966, 7
    %v968 = vsub.s32 %v965, %v967
    %v969 = vrot.slane %v962, %v968
    %v971 = vlaneseq
    %vm972 = vcmp.ge.s32.totalorder %v971, 0
    %vm973 = vcmp.lt.s32.totalorder %v971, 256
    %vm974 = vmand %vm972, %vm973
    %975 = vst.msk [vmem:[#allocation3] sm:$0x3] %vm974, %v969
    // Predicated region
    $region38: #{tpu_custom_call.1} parent=1 // pred_check
      _
    $region39: #{tpu_custom_call.1} parent=1 // pred_check_branch
      %977 = sbr.rel (0) target = $region41
    $region40: #{tpu_custom_call.1} parent=1 // pred_region
      %s979 = ssub.s32 32, 32
      %980 = vsyncadd [#allocation4], %s979
      %s982 = sshll.u32 [#allocation3], 4
      %s983 = int_to_ptr.vmem [resolvable:$true] %s982
      %985 = dma.vmem_to_hbm [thread:$0]  %s983, 32, %s9, [#allocation4]
    $region41: #{tpu_custom_call.1} parent=1 // pred_fallthru
      _
    // Predicated region
    $region42: #{tpu_custom_call.1} parent=1 // pred_check
      _
    $region43: #{tpu_custom_call.1} parent=1 // pred_check_branch
      %987 = sbr.rel (0) target = $region45
    $region44: #{tpu_custom_call.1} parent=1 // pred_region
      %988 = dma.done [#allocation4], 32
    $region45: #{tpu_custom_call.1} parent=1 // pred_fallthru
      _
    %989 = vsyncpa [#allocation4], 1

</llo_original>
